<compile_context>
chip_gen: v6e
topology: v6e:2x2x1
jax: 0.10.0
libtpu: 0.0.40
codegen_flags: <defaults>
</compile_context>

<pallas_src>
import jax
import jax.numpy as jnp
from jax.experimental import pallas as pl
from jax.experimental.pallas import tpu as pltpu

_MAX_TILE_BYTES = 4 * 1024 * 1024      # ~4 MiB per operand tile
_VMEM_LIMIT_BYTES = 32 * 1024 * 1024   # in+out double-buffered = 4 x tile bytes
_LANE_WIDTHS = (1024, 512, 256, 128)   # lane-dense last-dim candidates
_MIN_BYTES_FOR_SPLIT = 1 << 20         # force >=2 grid steps above this size


def _cdiv(a, b):
    return -(-a // b)


def _round_up(a, b):
    return _cdiv(a, b) * b


def _h_sigmoid_kernel(x_ref, o_ref):
    # relu6(x + 3) / 6  ==  clamp(x + 3, 0, 6) * (1/6).
    # Compute in f32 (matches PyTorch fp32-compute-then-cast; free, mem-bound).
    x = x_ref[...].astype(jnp.float32)
    y = jnp.minimum(jnp.maximum(x + 3.0, 0.0), 6.0) * (1.0 / 6.0)
    o_ref[...] = y.astype(o_ref.dtype)


def _h_sigmoid_2d(x2d):
    """h_sigmoid over a lane-dense (rows, width) view; width % 128 == 0."""
    rows, width = x2d.shape
    itemsize = jnp.dtype(x2d.dtype).itemsize
    sublane = max(8, 32 // itemsize)                    # 8 f32 / 16 bf16 / 32 i8

    # Keep tile *bytes* roughly constant across dtypes / widths.
    max_tile_rows = max(sublane, _MAX_TILE_BYTES // (width * itemsize))

    # Balanced tiling: split rows into nearly equal sublane-aligned tiles so
    # the clipped remainder is < one sublane tile, never a whole tile.
    num_tiles = _cdiv(rows, max_tile_rows)
    if rows * width * itemsize >= _MIN_BYTES_FOR_SPLIT and rows >= 2 * sublane:
        # >=2 parallel grid steps so multi-TC chips (v7x) share the work.
        num_tiles = max(num_tiles, 2)
    tile_rows = _round_up(_cdiv(rows, num_tiles), sublane)
    if tile_rows >= rows:
        tile_rows = rows            # single block: full second-to-last dim
    grid = (_cdiv(rows, tile_rows),)

    return pl.pallas_call(
        _h_sigmoid_kernel,
        out_shape=jax.ShapeDtypeStruct((rows, width), x2d.dtype),
        grid_spec=pltpu.PrefetchScalarGridSpec(
            num_scalar_prefetch=0,
            grid=grid,
            in_specs=[pl.BlockSpec((tile_rows, width), lambda i: (i, 0))],
            out_specs=pl.BlockSpec((tile_rows, width), lambda i: (i, 0)),
        ),
        compiler_params=pltpu.CompilerParams(
            dimension_semantics=("parallel",),
            vmem_limit_bytes=_VMEM_LIMIT_BYTES,
        ),
    )(x2d)


def h_sigmoid(x):
    """Elementwise hard-sigmoid, layout-agnostic (works directly on NCHW)."""
    orig_shape = x.shape
    n = x.size
    flat = x.reshape(-1)            # free (contiguous bitcast reshape)

    # Fast path: pick the widest lane-dense view that divides numel exactly.
    # No HBM-side padding / slicing at all; ragged *rows* relative to the tile
    # are handled by Pallas edge-block clipping inside the pipeline.
    width = None
    for w in _LANE_WIDTHS:
        if n >= w and n % w == 0:
            width = w
            break
    if width is not None:
        out2d = _h_sigmoid_2d(flat.reshape(n // width, width))
        return out2d.reshape(orig_shape)

    # Rare fallback: numel is not a multiple of 128 (cannot form a lane-dense
    # 2-D view without padding).  Pad the tail and slice it back.
    # TODO(synk): in-kernel masked tail store via scalar prefetch would avoid
    # this extra HBM pass for lane-ragged sizes.
    width = 512
    n_padded = _round_up(max(n, width), width)
    flat = jnp.pad(flat, (0, n_padded - n))
    out2d = _h_sigmoid_2d(flat.reshape(n_padded // width, width))
    return out2d.reshape(-1)[:n].reshape(orig_shape)


def _ref_h_sigmoid(x):
    xf = x.astype(jnp.float32)
    return (jnp.clip(xf + 3.0, 0.0, 6.0) / 6.0).astype(x.dtype)


if __name__ == "__main__":
    key = jax.random.PRNGKey(0)
    fn = jax.jit(h_sigmoid)

    # Primary shape consistent with the module's NCHW usage.
    N, C, H, W = 2, 4, 16, 16
    k0, k1, k2 = jax.random.split(key, 3)
    x = jax.random.normal(k0, (N, C, H, W), jnp.float32) * 4.0  # hit both clamps

    out = jax.block_until_ready(fn(x))
    assert out.shape == x.shape and out.dtype == x.dtype
    assert jnp.all(jnp.isfinite(out))
    assert jnp.allclose(out, _ref_h_sigmoid(x), atol=1e-6, rtol=1e-6)

    # Lane-ragged size -> fallback path.
    x_r = jax.random.normal(k1, (2, 3, 5, 7), jnp.float32) * 4.0
    out_r = jax.block_until_ready(fn(x_r))
    assert jnp.allclose(out_r, _ref_h_sigmoid(x_r), atol=1e-6, rtol=1e-6)

    # Larger array -> multi-step "parallel" grid with balanced tiles.
    x_b = jax.random.normal(k2, (4, 16, 64, 64), jnp.float32) * 4.0
    out_b = jax.block_until_ready(fn(x_b))
    assert jnp.allclose(out_b, _ref_h_sigmoid(x_b), atol=1e-6, rtol=1e-6)

    # bf16: dtype-aware sublane rounding + f32 compute inside the kernel.
    x_h = (jax.random.normal(k0, (N, C, H, W), jnp.float32) * 4.0).astype(jnp.bfloat16)
    out_h = jax.block_until_ready(fn(x_h))
    assert out_h.dtype == jnp.bfloat16
    assert jnp.allclose(out_h.astype(jnp.float32),
                        _ref_h_sigmoid(x_h).astype(jnp.float32),
                        atol=1e-2, rtol=1e-2)

    print("KERNEL_OK")
</pallas_src>

<mosaic_0001>
module attributes {stable_mosaic.version = 11 : i64} {
  func.func @_h_sigmoid_kernel(%arg0: i32, %arg1: memref<2x1024xf32, #tpu.memory_space<vmem>>, %arg2: memref<2x1024xf32, #tpu.memory_space<vmem>>) attributes {dimension_semantics = [#tpu.dimension_semantics<parallel>], iteration_bounds = array<i64: 1>, scalar_prefetch = 0 : i64, scratch_operands = 0 : i64, tpu.core_type = #tpu.core_type<tc>, window_params = [{transform_indices = @transform_0, window_bounds = array<i64: 2, 1024>}, {transform_indices = @transform_1, window_bounds = array<i64: 2, 1024>}]} {
    %c0 = arith.constant 0 : index
    %c0_0 = arith.constant 0 : index
    %0 = vector.load %arg1[%c0, %c0_0] : memref<2x1024xf32, #tpu.memory_space<vmem>>, vector<2x1024xf32>
    %cst = arith.constant 3.000000e+00 : f32
    %1 = vector.broadcast %cst : f32 to vector<2x1024xf32>
    %2 = arith.addf %0, %1 : vector<2x1024xf32>
    %cst_1 = arith.constant 0.000000e+00 : f32
    %3 = vector.broadcast %cst_1 : f32 to vector<2x1024xf32>
    %4 = arith.maximumf %2, %3 : vector<2x1024xf32>
    %cst_2 = arith.constant 6.000000e+00 : f32
    %5 = vector.broadcast %cst_2 : f32 to vector<2x1024xf32>
    %6 = arith.minimumf %4, %5 : vector<2x1024xf32>
    %cst_3 = arith.constant 0.166666672 : f32
    %7 = vector.broadcast %cst_3 : f32 to vector<2x1024xf32>
    %8 = arith.mulf %6, %7 : vector<2x1024xf32>
    %c0_4 = arith.constant 0 : index
    %c0_5 = arith.constant 0 : index
    %9 = vector.load %arg2[%c0_4, %c0_5] : memref<2x1024xf32, #tpu.memory_space<vmem>>, vector<2x1024xf32>
    tpu.vector_store %arg2[%c0_4, %c0_5], %8 {strides = array<i32>} : memref<2x1024xf32, #tpu.memory_space<vmem>>, vector<2x1024xf32>,
    return
  }
  func.func @transform_0(%arg0: i32) -> (i32, i32) {
    %c0_i32 = arith.constant 0 : i32
    %c0_i32_0 = arith.constant 0 : i32
    return %arg0, %c0_i32 : i32, i32
  }
  func.func @transform_1(%arg0: i32) -> (i32, i32) {
    %c0_i32 = arith.constant 0 : i32
    %c0_i32_0 = arith.constant 0 : i32
    return %arg0, %c0_i32 : i32, i32
  }
}

</mosaic_0001>

<llo_original>
// kernel: h_sigmoid.1
$region0: #{h_sigmoid.1}
  #allocation0 [shape = 'u32[]', space=smem, size = 0x4, offset = 0x4, fixed_abs, tag = 'smem constant byte address 0x4 - core index']
  #allocation1 [shape = 'u32[144,128]{1,0:T(1,128)}', space=vmem, size = 0x12000, scoped, tag = 'internal scratch']
  %s0 = inlined_call_operand.vmem [shape: f32[2,1024], index: 0, kind: input, shape index: {}]
  %s1 = inlined_call_operand.vmem [shape: f32[2,1024], index: 1, kind: output, shape index: {}]
  %s2 = sld [smem:[#allocation0]]
  $region14: #{h_sigmoid.1} parent=0
    _
  %s4 = ssub.s32 1, %s2
  %s5 = scalar_select 0, %s4, %s2
  // Predicated region
  $region2: #{h_sigmoid.1} parent=0 // pred_check
    _
  $region3: #{h_sigmoid.1} parent=0 // pred_check_branch
    %7 = sbr.rel (0) target = $region5
  $region4: #{h_sigmoid.1} parent=0 // pred_region
    _
  $region5: #{h_sigmoid.1} parent=0 // pred_fallthru
    _
  %v8 = vld [vmem:[%s0] sm:$0xff]
  %v9 = vld [vmem:[%s0 + $0x8] sm:$0xff]
  %v10 = vadd.f32 %v8, 3.0
  %v11 = vadd.f32 %v9, 3.0
  %v12 = vmax.f32 %v10, 0.0
  %v13 = vmax.f32 %v11, 0.0
  %v14 = vmin.f32 %v12, 6.0
  %v15 = vmin.f32 %v13, 6.0
  %v16 = vmul.f32 %v14, 0.16666667
  %v17 = vmul.f32 %v15, 0.16666667
  %18 = vst [vmem:[%s1] sm:$0xff] %v16
  %19 = vst [vmem:[%s1 + $0x8] sm:$0xff] %v17
  // Predicated region
  $region6: #{h_sigmoid.1} parent=0 // pred_check
    _
  $region7: #{h_sigmoid.1} parent=0 // pred_check_branch
    %21 = sbr.rel (0) target = $region9
  $region8: #{h_sigmoid.1} parent=0 // pred_region
    _
  $region9: #{h_sigmoid.1} parent=0 // pred_fallthru
    _
  // Predicated region
  $region10: #{h_sigmoid.1} parent=0 // pred_check
    _
  $region11: #{h_sigmoid.1} parent=0 // pred_check_branch
    %23 = sbr.rel (0) target = $region13
  $region12: #{h_sigmoid.1} parent=0 // pred_region
    _
  $region13: #{h_sigmoid.1} parent=0 // pred_fallthru
    _

</llo_original>
